<compile_context>
chip_gen: v7x
topology: tpu7x:2x2x1
jax: 0.10.0
libtpu: 0.0.40
codegen_flags: <defaults>
</compile_context>

<pallas_src>
import jax
import jax.numpy as jnp
from jax.experimental import pallas as pl
from jax.experimental.pallas import tpu as pltpu


def _decoder_hat_kernel(x_ref, w_ref, b_ref, out_ref, m_ref, l_ref):
    """Grid = (row_tiles, vocab_tiles); vocab axis is the inner reduction axis.

    Per step: (tm,H)bf16 @ (H,tn)bf16 -> (tm,tn) f32 logits (+ f32 bias), update the
    running row-max / row-sum-of-exp (online rescale), stash raw logits into the
    vocab-resident output block, and on the last vocab step normalize the whole block:
        out = logits - m_final - log(l_final)
    """
    j = pl.program_id(1)
    nv = pl.num_programs(1)
    tn = w_ref.shape[1]

    @pl.when(j == 0)
    def _init():
        m_ref[...] = jnp.full_like(m_ref, -jnp.inf)
        l_ref[...] = jnp.zeros_like(l_ref)

    # bf16 operands, f32 MXU accumulation; everything after stays f32.
    logits = jnp.dot(x_ref[...], w_ref[...],
                     preferred_element_type=jnp.float32) + b_ref[...]     # (tm, tn) f32

    # Online LSE: l = l_old * exp(m_old - m_new) + sum(exp(logits - m_new))
    m_old = m_ref[...]
    m_new = jnp.maximum(m_old, jnp.max(logits, axis=-1, keepdims=True))   # (tm, 1)
    l_ref[...] = (l_ref[...] * jnp.exp(m_old - m_new)
                  + jnp.sum(jnp.exp(logits - m_new), axis=-1, keepdims=True))
    m_ref[...] = m_new

    # Stash raw logits into the resident output block (lane-aligned when tn % 128 == 0).
    start = pl.multiple_of(j * tn, tn)
    out_ref[:, pl.ds(start, tn)] = logits.astype(out_ref.dtype)

    @pl.when(j == nv - 1)
    def _finalize():
        norm = m_ref[...] + jnp.log(l_ref[...])                           # (tm, 1) f32
        out_ref[...] = (out_ref[...].astype(jnp.float32) - norm).astype(out_ref.dtype)


def _round_up(x, m):
    return ((x + m - 1) // m) * m


def _pick_vocab_tile(V, target):
    """Largest multiple of 128 that divides V and is <= target; else V (single tile)."""
    if V <= target or V % 128 != 0:
        return V
    tn = (target // 128) * 128
    while tn >= 128 and V % tn != 0:
        tn -= 128
    return tn if tn >= 128 else V


def decoder_hat_forward(x, w_t, b, *, tm=256, tn=2048, out_dtype=jnp.float32):
    """
    x:   (..., H) float activations (H = 2*hidden_size if bidirectional else hidden_size)
    w_t: (H, V)   weights = transpose of PyTorch linear.weight (which is (V, H))
    b:   (V,)     bias (PyTorch linear.bias)
    returns: (..., V) log-probabilities in out_dtype (default f32, matching PyTorch).
    """
    H = x.shape[-1]
    V = w_t.shape[1]
    lead = x.shape[:-1]

    x2 = x.reshape(-1, H).astype(jnp.bfloat16)        # bf16 MXU operand
    w2 = w_t.astype(jnp.bfloat16)                     # bf16 MXU operand (streamed tiles)
    b2 = jnp.asarray(b, jnp.float32).reshape(1, V)    # bias stays f32

    N = x2.shape[0]
    # Row tile: multiple of 16 (bf16 sublane packing). No host-side pad: the ragged last
    # row tile is handled by Pallas edge blocks (row-local math, OOB output rows cropped).
    tile_m = min(_round_up(tm, 16), _round_up(N, 16))
    tile_n = _pick_vocab_tile(V, tn)
    grid = (pl.cdiv(N, tile_m), V // tile_n)

    # Explicit VMEM budget: double-buffered x / W / bias tiles, the vocab-resident output
    # block (double-buffered across row tiles), and the lane-padded (tm,1) stats scratch.
    out_bytes = jnp.dtype(out_dtype).itemsize
    vmem_bytes = (2 * tile_m * H * 2          # x tile (bf16)
                  + 2 * H * tile_n * 2        # W tile (bf16), streamed over vocab
                  + 2 * tile_n * 4            # bias tile (f32)
                  + 2 * tile_m * V * out_bytes   # output block, resident over vocab axis
                  + 2 * tile_m * 128 * 4)     # m / l scratch (lane padded)
    vmem_limit = int(min(max(2 * vmem_bytes, 32 << 20), 64 << 20))

    grid_spec = pltpu.PrefetchScalarGridSpec(
        num_scalar_prefetch=0,
        grid=grid,
        in_specs=[
            pl.BlockSpec((tile_m, H), lambda i, j: (i, 0)),    # row tile (constant over j)
            pl.BlockSpec((H, tile_n), lambda i, j: (0, j)),    # W streamed over vocab
            pl.BlockSpec((1, tile_n), lambda i, j: (0, j)),    # bias tile
        ],
        out_specs=pl.BlockSpec((tile_m, V), lambda i, j: (i, 0)),   # resident over vocab axis
        scratch_shapes=[
            pltpu.VMEM((tile_m, 1), jnp.float32),   # running row max
            pltpu.VMEM((tile_m, 1), jnp.float32),   # running sum(exp)
        ],
    )

    out = pl.pallas_call(
        _decoder_hat_kernel,
        grid_spec=grid_spec,
        out_shape=jax.ShapeDtypeStruct((N, V), out_dtype),
        compiler_params=pltpu.CompilerParams(
            dimension_semantics=("parallel", "arbitrary"),   # rows megacore-shardable
            vmem_limit_bytes=vmem_limit,
        ),
    )(x2, w2, b2)

    return out.reshape(*lead, V)


def decoder_hat_reference(x, w_t, b):
    """Pure-JAX f32 reference (PyTorch semantics)."""
    logits = x @ w_t + b
    return jax.nn.log_softmax(logits, axis=-1)


if __name__ == "__main__":
    hidden_size = 32
    bidirectional = True
    H = 2 * hidden_size if bidirectional else hidden_size   # 64
    V = 512                                                  # vocab_size (multiple of 128)
    L, B = 8, 2                                              # seq length x batch

    key = jax.random.PRNGKey(0)
    k_x, k_w, k_b, k_x2 = jax.random.split(key, 4)

    x = jax.random.normal(k_x, (L, B, H), jnp.float32)
    # PyTorch stores linear.weight as (V, H); we keep the transpose (H, V).
    w_t = jax.random.normal(k_w, (H, V), jnp.float32) * 0.1
    b = jax.random.normal(k_b, (V,), jnp.float32) * 0.1

    # tn=128 forces 4 vocab grid steps -> exercises the streamed-W / online-LSE path.
    out = decoder_hat_forward(x, w_t, b, tm=256, tn=128)
    out = jax.block_until_ready(out)
    assert out.shape == (L, B, V)

    # Tight check against a bf16-operand-consistent f32 reference (validates kernel math).
    xb = x.astype(jnp.bfloat16).astype(jnp.float32)
    wb = w_t.astype(jnp.bfloat16).astype(jnp.float32)
    ref_b = decoder_hat_reference(xb, wb, b)
    assert jnp.allclose(out, ref_b, atol=2e-3, rtol=2e-3)

    # Loose check against the pure-f32 PyTorch-equivalent reference (bf16 operand rounding).
    ref = decoder_hat_reference(x, w_t, b)
    assert jnp.allclose(out, ref, atol=5e-2, rtol=5e-2)

    # log-softmax sanity: rows sum to 1 in probability space.
    assert jnp.allclose(jnp.sum(jnp.exp(out), axis=-1), 1.0, atol=1e-3)

    # Ragged-row case: N = 40 rows with tile_m = 16 -> 3 row tiles, last one partial
    # (exercises the no-pad edge-block path).
    x_r = jax.random.normal(k_x2, (8, 5, H), jnp.float32)
    out_r = jax.block_until_ready(decoder_hat_forward(x_r, w_t, b, tm=16, tn=128))
    ref_r = decoder_hat_reference(x_r.astype(jnp.bfloat16).astype(jnp.float32), wb, b)
    assert out_r.shape == (8, 5, V)
    assert jnp.allclose(out_r, ref_r, atol=2e-3, rtol=2e-3)

    print("KERNEL_OK")
</pallas_src>

<mosaic_0001>
module attributes {stable_mosaic.version = 11 : i64} {
  func.func @_decoder_hat_kernel(%arg0: i32, %arg1: i32, %arg2: memref<16x64xbf16, #tpu.memory_space<vmem>>, %arg3: memref<64x128xbf16, #tpu.memory_space<vmem>>, %arg4: memref<1x128xf32, #tpu.memory_space<vmem>>, %arg5: memref<16x512xf32, #tpu.memory_space<vmem>>, %arg6: memref<16x1xf32, #tpu.memory_space<vmem>>, %arg7: memref<16x1xf32, #tpu.memory_space<vmem>>) attributes {dimension_semantics = [#tpu.dimension_semantics<parallel>, #tpu.dimension_semantics<arbitrary>], iteration_bounds = array<i64: 1, 4>, scalar_prefetch = 0 : i64, scratch_operands = 2 : i64, tpu.core_type = #tpu.core_type<tc>, window_params = [{transform_indices = @transform_0, window_bounds = array<i64: 16, 64>}, {transform_indices = @transform_1, window_bounds = array<i64: 64, 128>}, {transform_indices = @transform_2, window_bounds = array<i64: 1, 128>}, {transform_indices = @transform_3, window_bounds = array<i64: 16, 512>}]} {
    %c0_i32 = arith.constant 0 : i32
    %0 = arith.cmpi eq, %arg1, %c0_i32 : i32
    %1 = arith.extui %0 : i1 to i32
    %c0_i32_0 = arith.constant 0 : i32
    %2 = arith.cmpi ne, %1, %c0_i32_0 : i32
    scf.if %2 {
      %cst_18 = arith.constant 0xFF800000 : f32
      %32 = vector.broadcast %cst_18 : f32 to vector<16x1xf32>
      %c0_19 = arith.constant 0 : index
      %c0_20 = arith.constant 0 : index
      %33 = vector.load %arg6[%c0_19, %c0_20] : memref<16x1xf32, #tpu.memory_space<vmem>>, vector<16x1xf32>
      tpu.vector_store %arg6[%c0_19, %c0_20], %32 {strides = array<i32>} : memref<16x1xf32, #tpu.memory_space<vmem>>, vector<16x1xf32>,
      %cst_21 = arith.constant 0.000000e+00 : f32
      %34 = vector.broadcast %cst_21 : f32 to vector<16x1xf32>
      %c0_22 = arith.constant 0 : index
      %c0_23 = arith.constant 0 : index
      %35 = vector.load %arg7[%c0_22, %c0_23] : memref<16x1xf32, #tpu.memory_space<vmem>>, vector<16x1xf32>
      tpu.vector_store %arg7[%c0_22, %c0_23], %34 {strides = array<i32>} : memref<16x1xf32, #tpu.memory_space<vmem>>, vector<16x1xf32>,
    } else {
    }
    %c0 = arith.constant 0 : index
    %c0_1 = arith.constant 0 : index
    %3 = vector.load %arg2[%c0, %c0_1] : memref<16x64xbf16, #tpu.memory_space<vmem>>, vector<16x64xbf16>
    %c0_2 = arith.constant 0 : index
    %c0_3 = arith.constant 0 : index
    %4 = vector.load %arg3[%c0_2, %c0_3] : memref<64x128xbf16, #tpu.memory_space<vmem>>, vector<64x128xbf16>
    %cst = arith.constant dense<0.000000e+00> : vector<16x128xf32>
    %5 = tpu.matmul %3, %4, %cst {dimension_numbers = #tpu.dot_dimension_numbers<[1], [0], [0], [1], [0, 0, 1, 1], [], []>} : vector<16x64xbf16>, vector<64x128xbf16>, vector<16x128xf32> -> vector<16x128xf32>
    %c0_4 = arith.constant 0 : index
    %c0_5 = arith.constant 0 : index
    %6 = vector.load %arg4[%c0_4, %c0_5] : memref<1x128xf32, #tpu.memory_space<vmem>>, vector<1x128xf32>
    %7 = vector.broadcast %6 : vector<1x128xf32> to vector<16x128xf32>
    %8 = arith.addf %5, %7 : vector<16x128xf32>
    %c0_6 = arith.constant 0 : index
    %c0_7 = arith.constant 0 : index
    %9 = vector.load %arg6[%c0_6, %c0_7] : memref<16x1xf32, #tpu.memory_space<vmem>>, vector<16x1xf32>
    %cst_8 = arith.constant dense<0xFF800000> : vector<16xf32>
    %10 = vector.multi_reduction <maximumf>, %8, %cst_8 [1] : vector<16x128xf32> to vector<16xf32>
    %11 = vector.shape_cast %10 : vector<16xf32> to vector<16x1xf32>
    %12 = arith.maximumf %9, %11 : vector<16x1xf32>
    %c0_9 = arith.constant 0 : index
    %c0_10 = arith.constant 0 : index
    %13 = vector.load %arg7[%c0_9, %c0_10] : memref<16x1xf32, #tpu.memory_space<vmem>>, vector<16x1xf32>
    %14 = arith.subf %9, %12 : vector<16x1xf32>
    %15 = math.exp %14 : vector<16x1xf32>
    %16 = arith.mulf %13, %15 : vector<16x1xf32>
    %17 = vector.broadcast %12 : vector<16x1xf32> to vector<16x128xf32>
    %18 = arith.subf %8, %17 : vector<16x128xf32>
    %19 = math.exp %18 : vector<16x128xf32>
    %cst_11 = arith.constant dense<0.000000e+00> : vector<16xf32>
    %20 = vector.multi_reduction <add>, %19, %cst_11 [1] : vector<16x128xf32> to vector<16xf32>
    %21 = vector.shape_cast %20 : vector<16xf32> to vector<16x1xf32>
    %22 = arith.addf %16, %21 : vector<16x1xf32>
    %c0_12 = arith.constant 0 : index
    %c0_13 = arith.constant 0 : index
    %23 = vector.load %arg7[%c0_12, %c0_13] : memref<16x1xf32, #tpu.memory_space<vmem>>, vector<16x1xf32>
    tpu.vector_store %arg7[%c0_12, %c0_13], %22 {strides = array<i32>} : memref<16x1xf32, #tpu.memory_space<vmem>>, vector<16x1xf32>,
    %c0_14 = arith.constant 0 : index
    %c0_15 = arith.constant 0 : index
    %24 = vector.load %arg6[%c0_14, %c0_15] : memref<16x1xf32, #tpu.memory_space<vmem>>, vector<16x1xf32>
    tpu.vector_store %arg6[%c0_14, %c0_15], %12 {strides = array<i32>} : memref<16x1xf32, #tpu.memory_space<vmem>>, vector<16x1xf32>,
    %c128_i32 = arith.constant 128 : i32
    %25 = arith.muli %arg1, %c128_i32 : i32
    %26 = tpu.assume_multiple %25, 128 : i32
    %c0_16 = arith.constant 0 : index
    %27 = arith.index_cast %26 : i32 to index
    %28 = vector.load %arg5[%c0_16, %27] : memref<16x512xf32, #tpu.memory_space<vmem>>, vector<16x128xf32>
    tpu.vector_store %arg5[%c0_16, %27], %8 {strides = array<i32>} : memref<16x512xf32, #tpu.memory_space<vmem>>, vector<16x128xf32>,
    %c3_i32 = arith.constant 3 : i32
    %29 = arith.cmpi eq, %arg1, %c3_i32 : i32
    %30 = arith.extui %29 : i1 to i32
    %c0_i32_17 = arith.constant 0 : i32
    %31 = arith.cmpi ne, %30, %c0_i32_17 : i32
    scf.if %31 {
      %c0_18 = arith.constant 0 : index
      %c0_19 = arith.constant 0 : index
      %32 = vector.load %arg6[%c0_18, %c0_19] : memref<16x1xf32, #tpu.memory_space<vmem>>, vector<16x1xf32>
      %c0_20 = arith.constant 0 : index
      %c0_21 = arith.constant 0 : index
      %33 = vector.load %arg7[%c0_20, %c0_21] : memref<16x1xf32, #tpu.memory_space<vmem>>, vector<16x1xf32>
      %34 = math.log %33 : vector<16x1xf32>
      %35 = arith.addf %32, %34 : vector<16x1xf32>
      %c0_22 = arith.constant 0 : index
      %c0_23 = arith.constant 0 : index
      %36 = vector.load %arg5[%c0_22, %c0_23] : memref<16x512xf32, #tpu.memory_space<vmem>>, vector<16x512xf32>
      %37 = vector.broadcast %35 : vector<16x1xf32> to vector<16x512xf32>
      %38 = arith.subf %36, %37 : vector<16x512xf32>
      %c0_24 = arith.constant 0 : index
      %c0_25 = arith.constant 0 : index
      %39 = vector.load %arg5[%c0_24, %c0_25] : memref<16x512xf32, #tpu.memory_space<vmem>>, vector<16x512xf32>
      tpu.vector_store %arg5[%c0_24, %c0_25], %38 {strides = array<i32>} : memref<16x512xf32, #tpu.memory_space<vmem>>, vector<16x512xf32>,
    } else {
    }
    return
  }
  func.func @transform_0(%arg0: i32, %arg1: i32) -> (i32, i32) {
    %c0_i32 = arith.constant 0 : i32
    %c0_i32_0 = arith.constant 0 : i32
    return %arg0, %c0_i32 : i32, i32
  }
  func.func @transform_1(%arg0: i32, %arg1: i32) -> (i32, i32) {
    %c0_i32 = arith.constant 0 : i32
    %c0_i32_0 = arith.constant 0 : i32
    return %c0_i32, %arg1 : i32, i32
  }
  func.func @transform_2(%arg0: i32, %arg1: i32) -> (i32, i32) {
    %c0_i32 = arith.constant 0 : i32
    %c0_i32_0 = arith.constant 0 : i32
    return %c0_i32, %arg1 : i32, i32
  }
  func.func @transform_3(%arg0: i32, %arg1: i32) -> (i32, i32) {
    %c0_i32 = arith.constant 0 : i32
    %c0_i32_0 = arith.constant 0 : i32
    return %arg0, %c0_i32 : i32, i32
  }
}

</mosaic_0001>

<llo_original>
// kernel: tpu_custom_call.1
$region0: #{tpu_custom_call.1}
  #allocation0 [shape = 'u32[]', space=smem, size = 0x4, offset = 0x4, fixed_abs, tag = 'smem constant byte address 0x4 - core index']
  #allocation1 [shape = 'u32[144,128]{1,0:T(1,128)}', space=vmem, size = 0x12000, scoped, tag = 'internal scratch']
  #allocation2 [shape = 'f32[16,1]{1,0:T(8,128)}', space=vmem, size = 0x2000, scoped, tag = 'scratch operand']
  #allocation3 [shape = 'f32[16,1]{1,0:T(8,128)}', space=vmem, size = 0x2000, scoped, tag = 'scratch operand']
  %s0 = inlined_call_operand.hbm [shape: bf16[16,64], index: 0, kind: input, shape index: {}]
  %s1 = inlined_call_operand.hbm [shape: bf16[64,512], index: 1, kind: input, shape index: {}]
  %s2 = inlined_call_operand.vmem [shape: f32[1,512], index: 2, kind: input, shape index: {}]
  %s3 = inlined_call_operand.hbm [shape: f32[16,512], index: 3, kind: output, shape index: {}]
  %s4 = sld [smem:[#allocation0]]
  $region61: #{tpu_custom_call.1} parent=0
    _
  %s6 = ssub.s32 1, %s4
  %s7 = scalar_select 0, %s6, %s4
  $region1: #{tpu_custom_call.1} parent=0
    #allocation4 [shape = 'u8[4096]{0}', space=vmem, size = 0x1000, scoped, tag = 'input window, operand 0, single buffered']
    #allocation5 [shape = 's32[2]{0}', space=sflag, size = 0x8, scoped, tag = 'scoped memory for tpu_custom_call.1']
    #allocation6 [shape = 's32[2]{0}', space=sflag, size = 0x8, scoped, tag = 'scoped memory for tpu_custom_call.1']
    #allocation7 [shape = 'u8[32768]{0}', space=vmem, size = 0x8000, scoped, tag = 'input window, operand 1']
    #allocation8 [shape = 's32[2]{0}', space=sflag, size = 0x8, scoped, tag = 'scoped memory for tpu_custom_call.1']
    #allocation9 [shape = 'u8[32768]{0}', space=vmem, size = 0x8000, scoped, tag = 'output window, operand 0, single buffered']
    %8 = vsyncpa [#allocation5], 0
    %9 = vsyncpa [#allocation8], 0
    %s10 = scalar_lea.sflag [#allocation8], 1
    %11 = vsyncpa %s10, 0
    %12 = vsyncpa [#allocation6], 0
    loop: start=0, step=1, limit=6
    $region2: #{tpu_custom_call.1} parent=1 // loop_pre_header
      _
    $region3: #{tpu_custom_call.1} parent=1 // loop_header
      %s14 = sphi 0, %s18
      %p15 = scmp.ge.s32.totalorder %s14, 6
      %s21 = sphi 0, %s33
      %s22 = sphi 0, %s29
      %s23 = sphi 0, %s21
      %s24 = sphi 0, %s22
      %s25 = sphi 0, %s23
      %s26 = sphi 0, %s24
      %s36 = sphi 0, %s38
      %s39 = sphi 0, %s36
      %s40 = sphi 0, %s39
      %s56 = sphi 0, %s40
      %s62 = sphi 0, %s64
      %s65 = sphi 0, %s62
      %s66 = sphi 0, %s65
      %s82 = sphi 0, %s66
      %s88 = sphi 0, %s90
      %s91 = sphi 0, %s88
      %s92 = sphi 0, %s91
      %s108 = sphi 0, %s92
      %s114 = sphi 0, %s116
      %s117 = sphi 0, %s114
      %s118 = sphi 0, %s117
      %s134 = sphi 0, %s118
    $region4: #{tpu_custom_call.1} parent=1 // loop_header_branch
      %17 = sbr.rel (%p15) target = $region8
    $region5: #{tpu_custom_call.1} parent=1 // loop_body
      %s19 = ssub.s32 %s14, 1
      %s20 = ssub.s32 %s14, 2
      %s27 = sadd.s32 1, %s22
      %p28 = scmp.ge.s32.totalorder %s27, 4
      %s29 = scalar_select %p28, 0, %s27
      %s30 = sadd.s32 1, %s21
      %s31 = scalar_select %p28, %s30, %s21
      %p32 = scmp.ge.s32.totalorder %s31, 1
      %s33 = scalar_select %p32, 0, %s31
      %s34 = ssub.s32 %s21, %s33
      %p35 = scmp.eq.s32.totalorder %s34, 0
      %s37 = sadd.s32 %s36, 1
      %s38 = scalar_select %p35, %s36, %s37
      %p41 = pneg %p35
      %p42 = scmp.eq.s32.totalorder %s14, 3
      %p43 = por %p41, %p42
      %p44 = scmp.ne.s32.totalorder %s36, %s39
      %p45 = scmp.eq.s32.totalorder %s14, 0
      %p46 = por %p44, %p45
      %p47 = scmp.ne.s32.totalorder %s36, %s39
      %p48 = scmp.eq.s32.totalorder %s19, 3
      %p49 = por %p47, %p48
      %p50 = scmp.ne.s32.totalorder %s39, %s40
      %p51 = scmp.eq.s32.totalorder %s19, 0
      %p52 = por %p50, %p51
      %p53 = scmp.ne.s32.totalorder %s39, %s40
      %p54 = scmp.eq.s32.totalorder %s20, 3
      %p55 = por %p53, %p54
      %p57 = scmp.ne.s32.totalorder %s40, %s56
      %p58 = scmp.eq.s32.totalorder %s20, 0
      %p59 = por %p57, %p58
      %s60 = ssub.s32 %s22, %s29
      %p61 = scmp.eq.s32.totalorder %s60, 0
      %s63 = sadd.s32 %s62, 1
      %s64 = scalar_select %p61, %s62, %s63
      %p67 = pneg %p61
      %p68 = scmp.eq.s32.totalorder %s14, 3
      %p69 = por %p67, %p68
      %p70 = scmp.ne.s32.totalorder %s62, %s65
      %p71 = scmp.eq.s32.totalorder %s14, 0
      %p72 = por %p70, %p71
      %p73 = scmp.ne.s32.totalorder %s62, %s65
      %p74 = scmp.eq.s32.totalorder %s19, 3
      %p75 = por %p73, %p74
      %p76 = scmp.ne.s32.totalorder %s65, %s66
      %p77 = scmp.eq.s32.totalorder %s19, 0
      %p78 = por %p76, %p77
      %p79 = scmp.ne.s32.totalorder %s65, %s66
      %p80 = scmp.eq.s32.totalorder %s20, 3
      %p81 = por %p79, %p80
      %p83 = scmp.ne.s32.totalorder %s66, %s82
      %p84 = scmp.eq.s32.totalorder %s20, 0
      %p85 = por %p83, %p84
      %s86 = ssub.s32 %s22, %s29
      %p87 = scmp.eq.s32.totalorder %s86, 0
      %s89 = sadd.s32 %s88, 1
      %s90 = scalar_select %p87, %s88, %s89
      %p93 = pneg %p87
      %p94 = scmp.eq.s32.totalorder %s14, 3
      %p95 = por %p93, %p94
      %p96 = scmp.ne.s32.totalorder %s88, %s91
      %p97 = scmp.eq.s32.totalorder %s14, 0
      %p98 = por %p96, %p97
      %p99 = scmp.ne.s32.totalorder %s88, %s91
      %p100 = scmp.eq.s32.totalorder %s19, 3
      %p101 = por %p99, %p100
      %p102 = scmp.ne.s32.totalorder %s91, %s92
      %p103 = scmp.eq.s32.totalorder %s19, 0
      %p104 = por %p102, %p103
      %p105 = scmp.ne.s32.totalorder %s91, %s92
      %p106 = scmp.eq.s32.totalorder %s20, 3
      %p107 = por %p105, %p106
      %p109 = scmp.ne.s32.totalorder %s92, %s108
      %p110 = scmp.eq.s32.totalorder %s20, 0
      %p111 = por %p109, %p110
      %s112 = ssub.s32 %s21, %s33
      %p113 = scmp.eq.s32.totalorder %s112, 0
      %s115 = sadd.s32 %s114, 1
      %s116 = scalar_select %p113, %s114, %s115
      %p119 = pneg %p113
      %p120 = scmp.eq.s32.totalorder %s14, 3
      %p121 = por %p119, %p120
      %p122 = scmp.ne.s32.totalorder %s114, %s117
      %p123 = scmp.eq.s32.totalorder %s14, 0
      %p124 = por %p122, %p123
      %p125 = scmp.ne.s32.totalorder %s114, %s117
      %p126 = scmp.eq.s32.totalorder %s19, 3
      %p127 = por %p125, %p126
      %p128 = scmp.ne.s32.totalorder %s117, %s118
      %p129 = scmp.eq.s32.totalorder %s19, 0
      %p130 = por %p128, %p129
      %p131 = scmp.ne.s32.totalorder %s117, %s118
      %p132 = scmp.eq.s32.totalorder %s20, 3
      %p133 = por %p131, %p132
      %p135 = scmp.ne.s32.totalorder %s118, %s134
      %p136 = scmp.eq.s32.totalorder %s20, 0
      %p137 = por %p135, %p136
      %p138 = scmp.le.s32.totalorder 1, %s14
      %p139 = scmp.lt.s32.totalorder %s14, 5
      %p140 = pnand %p138, %p139
      %p141 = pneg %p140
      // Predicated region
      $region9: #{tpu_custom_call.1} parent=5 // pred_check
        _
      $region10: #{tpu_custom_call.1} parent=5 // pred_check_branch
        %143 = sbr.rel (%p140) target = $region12
      $region11: #{tpu_custom_call.1} parent=5 // pred_region
        %s144 = ssub.s32 %s14, 1
        // Predicated region
        $region13: #{tpu_custom_call.1} parent=11 // pred_check
          %p145 = pneg %p52
        $region14: #{tpu_custom_call.1} parent=11 // pred_check_branch
          %147 = sbr.rel (%p145) target = $region16
        $region15: #{tpu_custom_call.1} parent=11 // pred_region
          %s148 = smul.u32 2, %s23
          %s150 = ssub.s32 128, 128
          %151 = vsyncadd [#allocation5], %s150
          %s152 = smul.addr %s148, 64
          %s153 = scalar_lea.hbm %s0, %s152
          %s154 = sshll.u32 [#allocation4], 4
          %s155 = int_to_ptr.vmem [resolvable:$true] %s154
          %160 = dma.hbm_to_vmem [thread:$0]  %s153, 128, %s155, [#allocation5], 64, 64, 4
        $region16: #{tpu_custom_call.1} parent=11 // pred_fallthru
          _
      $region12: #{tpu_custom_call.1} parent=5 // pred_fallthru
        _
      %p161 = scmp.lt.s32.totalorder %s14, 4
      // Predicated region
      $region17: #{tpu_custom_call.1} parent=5 // pred_check
        %p162 = pneg %p161
      $region18: #{tpu_custom_call.1} parent=5 // pred_check_branch
        %164 = sbr.rel (%p162) target = $region20
      $region19: #{tpu_custom_call.1} parent=5 // pred_region
        // Predicated region
        $region21: #{tpu_custom_call.1} parent=19 // pred_check
          %p165 = pneg %p72
        $region22: #{tpu_custom_call.1} parent=19 // pred_check_branch
          %167 = sbr.rel (%p165) target = $region24
        $region23: #{tpu_custom_call.1} parent=19 // pred_region
          %s168 = sand.u32 %s62, 1
          %s169 = scalar_lea.sflag [#allocation8], %s168
          %s170 = sand.u32 %s62, 1
          %s171 = smul.addr %s170, 32
          %s172 = scalar_lea.vmem [#allocation7], %s171
          %s174 = ssub.s32 512, 512
          %175 = vsyncadd %s169, %s174
          %s176 = smul.addr %s22, 64
          %s177 = scalar_lea.hbm %s1, %s176
          %s178 = sshll.u32 %s172, 4
          %s179 = int_to_ptr.vmem [resolvable:$true] %s178
          %184 = dma.hbm_to_vmem [thread:$0]  %s177, 512, %s179, %s169, 256, 64, 4
        $region24: #{tpu_custom_call.1} parent=19 // pred_fallthru
          _
        // Predicated region
        $region25: #{tpu_custom_call.1} parent=19 // pred_check
          %p185 = pneg %p98
        $region26: #{tpu_custom_call.1} parent=19 // pred_check_branch
          %187 = sbr.rel (%p185) target = $region28
        $region27: #{tpu_custom_call.1} parent=19 // pred_region
          %p188 = scmp.lt.s32.totalorder %s22, 3
          %s189 = scalar_select %p188, %s22, 3
          %s190 = scalar_lea.vmem %s2, %s189
        $region28: #{tpu_custom_call.1} parent=19 // pred_fallthru
          _
      $region20: #{tpu_custom_call.1} parent=5 // pred_fallthru
        _
      %p191 = scmp.le.s32.totalorder 1, %s14
      %p192 = scmp.lt.s32.totalorder %s14, 5
      %p193 = pnand %p191, %p192
      %p194 = pneg %p193
      // Predicated region
      $region29: #{tpu_custom_call.1} parent=5 // pred_check
        _
      $region30: #{tpu_custom_call.1} parent=5 // pred_check_branch
        %196 = sbr.rel (%p193) target = $region32
      $region31: #{tpu_custom_call.1} parent=5 // pred_region
        %s197 = ssub.s32 %s14, 1
        // Predicated region
        $region33: #{tpu_custom_call.1} parent=31 // pred_check
          %p198 = pneg %p52
        $region34: #{tpu_custom_call.1} parent=31 // pred_check_branch
          %200 = sbr.rel (%p198) target = $region36
        $region35: #{tpu_custom_call.1} parent=31 // pred_region
          %201 = dma.done [#allocation5], 128
        $region36: #{tpu_custom_call.1} parent=31 // pred_fallthru
          _
        %s202 = sand.u32 %s65, 1
        %s203 = scalar_lea.sflag [#allocation8], %s202
        %s204 = sand.u32 %s65, 1
        %s205 = smul.addr %s204, 32
        %s206 = scalar_lea.vmem [#allocation7], %s205
        // Predicated region
        $region37: #{tpu_custom_call.1} parent=31 // pred_check
          %p207 = pneg %p78
        $region38: #{tpu_custom_call.1} parent=31 // pred_check_branch
          %209 = sbr.rel (%p207) target = $region40
        $region39: #{tpu_custom_call.1} parent=31 // pred_region
          %210 = dma.done %s203, 512
        $region40: #{tpu_custom_call.1} parent=31 // pred_fallthru
          _
        %p211 = pneg %p52
        %p212 = pneg %p49
        %s213 = sand.u32 %s65, 1
        %s214 = scalar_lea.sflag [#allocation8], %s213
        %s215 = sand.u32 %s65, 1
        %s216 = smul.addr %s215, 32
        %s217 = scalar_lea.vmem [#allocation7], %s216
        %p218 = pneg %p78
        %p219 = pneg %p75
        %p220 = scmp.lt.s32.totalorder %s24, 3
        %s221 = scalar_select %p220, %s24, 3
        %s222 = scalar_lea.vmem %s2, %s221
        %p223 = pneg %p104
        %p224 = pneg %p101
        %p225 = pneg %p130
        %p226 = pneg %p127
        %s227 = smul.u32 2, %s23
        %p228 = scmp.lt.s32.totalorder %s24, 3
        %s229 = scalar_select %p228, %s24, 3
        %s230 = scalar_lea.vmem %s2, %s229
        %s231 = smul.u32 2, %s23
        %p233 = scmp.eq.s32.totalorder %s24, 0
        // Predicated region
        $region41: #{tpu_custom_call.1} parent=31 // pred_check
          %p234 = pneg %p233
        $region42: #{tpu_custom_call.1} parent=31 // pred_check_branch
          %236 = sbr.rel (%p234) target = $region44
        $region43: #{tpu_custom_call.1} parent=31 // pred_region
          %vm237 = vcmask 7168
          %238 = vst.msk [vmem:[#allocation2] sm:$0xff] %vm237, -inf
          %239 = vst.msk [vmem:[#allocation2 + $0x8] sm:$0xff] %vm237, -inf
          %240 = vst.msk [vmem:[#allocation3] sm:$0xff] %vm237, 0.0
          %241 = vst.msk [vmem:[#allocation3 + $0x8] sm:$0xff] %vm237, 0.0
        $region44: #{tpu_custom_call.1} parent=31 // pred_fallthru
          _
        %v242 = vld [vmem:[#allocation4] sm:$0xf]
        %v243 = vld [vmem:[#allocation4 + $0x4] sm:$0xf]
        %v244 = vld [vmem:[%s206] sm:$0xf]
        %v245 = vld [vmem:[%s206 + $0x4] sm:$0xf]
        %v246 = vld [vmem:[%s206 + $0x8] sm:$0xf]
        %v247 = vld [vmem:[%s206 + $0xc] sm:$0xf]
        %v248 = vld [vmem:[%s206 + $0x10] sm:$0xf]
        %v249 = vld [vmem:[%s206 + $0x14] sm:$0xf]
        %v250 = vld [vmem:[%s206 + $0x18] sm:$0xf]
        %v251 = vld [vmem:[%s206 + $0x1c] sm:$0xf]
        %v252 = vld [vmem:[%s230] sm:$0x1]
        %v254 = vlaneseq
        %v255 = vshrl.u32 %v254, 7
        %v256 = vsub.s32 0, %v255
        %v257 = vrot.slane %v252, %v256
        %v261 = vunpack.c.l.b16 %v242
        %v262 = vunpack.c.l.b16 %v243
        %v263 = vpack.c.b16 %v262, %v261
        %v272 = vunpack.c.l.b16 %v244
        %v273 = vunpack.c.l.b16 %v245
        %v274 = vunpack.c.l.b16 %v246
        %v275 = vunpack.c.l.b16 %v247
        %v276 = vunpack.c.l.b16 %v248
        %v277 = vunpack.c.l.b16 %v249
        %v278 = vunpack.c.l.b16 %v250
        %v279 = vunpack.c.l.b16 %v251
        %v280 = vpack.c.b16 %v273, %v272
        %v281 = vpack.c.b16 %v275, %v274
        %v282 = vpack.c.b16 %v277, %v276
        %v283 = vpack.c.b16 %v279, %v278
        %vm288 = vcmask 523264
        %v290 = vsel %vm288, %v263, 0
        %292 = vmatprep.subr.bf16.mxu0 0
        %293 = vmatpush1.bf16.msra.mxu0 %v280
        %294 = vmatprep.subr.bf16.mxu0 0
        %295 = vmatpush1.bf16.msra.mxu0 %v281
        %296 = vmatprep.subr.bf16.mxu0 0
        %297 = vmatpush1.bf16.msra.mxu0 %v282
        %298 = vmatprep.subr.bf16.mxu0 0
        %299 = vmatpush1.bf16.msra.mxu0 %v283
        %300 = vmatprep.subr.bf16.mxu0 0
        %301 = vmatpush1.bf16.msra.mxu0 0
        %302 = vmatprep.subr.bf16.mxu0 0
        %303 = vmatpush1.bf16.msra.mxu0 0
        %304 = vmatprep.subr.bf16.mxu0 0
        %305 = vmatpush1.bf16.msra.mxu0 0
        %306 = vmatprep.subr.bf16.mxu0 0
        %307 = vmatpush1.bf16.msra.mxu0 0
        %308 = vmatprep.subr.bf16.mxu0 0
        %309 = vmatpush1.bf16.msra.mxu0 0
        %310 = vmatprep.subr.bf16.mxu0 0
        %311 = vmatpush1.bf16.msra.mxu0 0
        %312 = vmatprep.subr.bf16.mxu0 0
        %313 = vmatpush1.bf16.msra.mxu0 0
        %314 = vmatprep.subr.bf16.mxu0 0
        %315 = vmatpush1.bf16.msra.mxu0 0
        %316 = vmatprep.subr.bf16.mxu0 0
        %317 = vmatpush1.bf16.msra.mxu0 0
        %318 = vmatprep.subr.bf16.mxu0 0
        %319 = vmatpush1.bf16.msra.mxu0 0
        %320 = vmatprep.subr.bf16.mxu0 0
        %321 = vmatpush1.bf16.msra.mxu0 0
        %322 = vmatprep.subr.bf16.mxu0 0
        %323 = vmatpush1.bf16.msra.mxu0 0
        %324 = vmatprep.mubr.bf16.mxu0 0
        %325 = vmatmul.mubr.bf16.gmra.mrb[0].mxu0 %v290
        %v326 = vpop.f32.mrb[0].mxu0
        %v327 = vadd.f32 %v257, %v326
        %v328 = vpop.f32.mrb[0].mxu0
        %v329 = vpop.f32.mrb[0].mxu0
        %v330 = vadd.f32 %v257, %v329
        %v331 = vpop.f32.mrb[0].mxu0
        %332 = vdwg.mxu0
        %v333 = vld [vmem:[#allocation2] sm:$0xff]
        %v334 = vld [vmem:[#allocation2 + $0x8] sm:$0xff]
        %335 = vmax.xlane.f32.xlu0 %v327
        %v336 = vpop.xlane.xlu0 %335
        %337 = vmax.xlane.f32.xlu0 %v330
        %v338 = vpop.xlane.xlu0 %337
        %v339 = vmax.f32 %v333, %v336
        %v340 = vmax.f32 %v334, %v338
        %v341 = vld [vmem:[#allocation3] sm:$0xff]
        %v342 = vld [vmem:[#allocation3 + $0x8] sm:$0xff]
        %v343 = vsub.f32 %v333, %v339
        %v344 = vsub.f32 %v334, %v340
        %v345 = vmul.f32 %v343, 1.442695
        %v346 = vpow.pop %v345
        %v347 = vmul.f32 %v344, 1.442695
        %v348 = vpow.pop %v347
        %v349 = vmul.f32 %v341, %v346
        %v350 = vmul.f32 %v342, %v348
        %352 = vset.pattern.permute.xlu0 0
        %353 = vperm.xlu0 %352, %v339
        %v354 = vpop.permute.xlu0 %353
        %357 = vset.pattern.permute.xlu0 0
        %358 = vperm.xlu0 %357, %v340
        %v359 = vpop.permute.xlu0 %358
        %v361 = vsub.f32 %v327, %v354
        %v362 = vsub.f32 %v330, %v359
        %v363 = vmul.f32 %v361, 1.442695
        %v364 = vpow.pop %v363
        %v365 = vmul.f32 %v362, 1.442695
        %v366 = vpow.pop %v365
        %367 = vadd.xlane.f32.xlu0 %v364
        %v368 = vpop.xlane.xlu0 %367
        %369 = vadd.xlane.f32.xlu0 %v366
        %v370 = vpop.xlane.xlu0 %369
        %v371 = vadd.f32 %v349, %v368
        %v372 = vadd.f32 %v350, %v370
        %vm373 = vcmask 7168
        %374 = vst.msk [vmem:[#allocation3] sm:$0xff] %vm373, %v371
        %375 = vst.msk [vmem:[#allocation3 + $0x8] sm:$0xff] %vm373, %v372
        %376 = vst.msk [vmem:[#allocation2] sm:$0xff] %vm373, %v339
        %377 = vst.msk [vmem:[#allocation2 + $0x8] sm:$0xff] %vm373, %v340
        %s378 = smul.u32 %s24, 128
        %s379 = sshra.s32 %s378, 7
        %s380 = sand.u32 %s378, 127
        %s381 = smul.addr %s379, 8
        %s382 = scalar_lea.vmem [#allocation9], %s381
        %383 = vst [vmem:[%s382] sm:$0xff] %v327
        %384 = vst [vmem:[%s382 + $0x20] sm:$0xff] %v330
        %p385 = scmp.eq.s32.totalorder %s24, 3
        // Predicated region
        $region45: #{tpu_custom_call.1} parent=31 // pred_check
          %p386 = pneg %p385
        $region46: #{tpu_custom_call.1} parent=31 // pred_check_branch
          %388 = sbr.rel (%p386) target = $region48
        $region47: #{tpu_custom_call.1} parent=31 // pred_region
          %v389 = vld [vmem:[#allocation2] sm:$0xff]
          %v390 = vld [vmem:[#allocation2 + $0x8] sm:$0xff]
          %v391 = vld [vmem:[#allocation3] sm:$0xff]
          %v392 = vld [vmem:[#allocation3 + $0x8] sm:$0xff]
          %v393 = vlog2.pop %v391
          %v394 = vmul.f32 %v393, 0.6931472
          %v395 = vlog2.pop %v392
          %v396 = vmul.f32 %v395, 0.6931472
          %v397 = vadd.f32 %v389, %v394
          %v398 = vadd.f32 %v390, %v396
          %v399 = vld [vmem:[#allocation9] sm:$0xff]
          %v400 = vld [vmem:[#allocation9 + $0x8] sm:$0xff]
          %v401 = vld [vmem:[#allocation9 + $0x10] sm:$0xff]
          %v402 = vld [vmem:[#allocation9 + $0x18] sm:$0xff]
          %v403 = vld [vmem:[#allocation9 + $0x20] sm:$0xff]
          %v404 = vld [vmem:[#allocation9 + $0x28] sm:$0xff]
          %v405 = vld [vmem:[#allocation9 + $0x30] sm:$0xff]
          %v406 = vld [vmem:[#allocation9 + $0x38] sm:$0xff]
          %408 = vset.pattern.permute.xlu0 0
          %409 = vperm.xlu0 %408, %v397
          %v410 = vpop.permute.xlu0 %409
          %413 = vset.pattern.permute.xlu0 0
          %414 = vperm.xlu0 %413, %v398
          %v415 = vpop.permute.xlu0 %414
          %v417 = vsub.f32 %v399, %v410
          %v418 = vsub.f32 %v400, %v410
          %v419 = vsub.f32 %v401, %v410
          %v420 = vsub.f32 %v402, %v410
          %v421 = vsub.f32 %v403, %v415
          %v422 = vsub.f32 %v404, %v415
          %v423 = vsub.f32 %v405, %v415
          %v424 = vsub.f32 %v406, %v415
          %425 = vst [vmem:[#allocation9] sm:$0xff] %v417
          %426 = vst [vmem:[#allocation9 + $0x8] sm:$0xff] %v418
          %427 = vst [vmem:[#allocation9 + $0x10] sm:$0xff] %v419
          %428 = vst [vmem:[#allocation9 + $0x18] sm:$0xff] %v420
          %429 = vst [vmem:[#allocation9 + $0x20] sm:$0xff] %v421
          %430 = vst [vmem:[#allocation9 + $0x28] sm:$0xff] %v422
          %431 = vst [vmem:[#allocation9 + $0x30] sm:$0xff] %v423
          %432 = vst [vmem:[#allocation9 + $0x38] sm:$0xff] %v424
        $region48: #{tpu_custom_call.1} parent=31 // pred_fallthru
          _
        // Predicated region
        $region49: #{tpu_custom_call.1} parent=31 // pred_check
          %p433 = pneg %p127
        $region50: #{tpu_custom_call.1} parent=31 // pred_check_branch
          %435 = sbr.rel (%p433) target = $region52
        $region51: #{tpu_custom_call.1} parent=31 // pred_region
          %s436 = smul.u32 2, %s23
          %s438 = ssub.s32 1024, 1024
          %439 = vsyncadd [#allocation6], %s438
          %s440 = smul.addr %s436, 4
          %s441 = smul.addr %s440, 128
          %s442 = scalar_lea.hbm %s3, %s441
          %s443 = sshll.u32 [#allocation9], 4
          %s444 = int_to_ptr.vmem [resolvable:$true] %s443
          %449 = dma.vmem_to_hbm [thread:$0]  %s444, 1024, %s442, [#allocation6], 512, 512, 32
        $region52: #{tpu_custom_call.1} parent=31 // pred_fallthru
          _
        // Predicated region
        $region53: #{tpu_custom_call.1} parent=31 // pred_check
          %p450 = pneg %p127
        $region54: #{tpu_custom_call.1} parent=31 // pred_check_branch
          %452 = sbr.rel (%p450) target = $region56
        $region55: #{tpu_custom_call.1} parent=31 // pred_region
          %453 = dma.done [#allocation6], 1024
        $region56: #{tpu_custom_call.1} parent=31 // pred_fallthru
          _
      $region32: #{tpu_custom_call.1} parent=5 // pred_fallthru
        _
      %p454 = scmp.le.s32.totalorder 2, %s14
      // Predicated region
      $region57: #{tpu_custom_call.1} parent=5 // pred_check
        %p455 = pneg %p454
      $region58: #{tpu_custom_call.1} parent=5 // pred_check_branch
        %457 = sbr.rel (%p455) target = $region60
      $region59: #{tpu_custom_call.1} parent=5 // pred_region
        %s458 = ssub.s32 %s14, 2
      $region60: #{tpu_custom_call.1} parent=5 // pred_fallthru
        _
    $region6: #{tpu_custom_call.1} parent=1 // loop_footer
      %s18 = sadd.s32 1, %s14
    $region7: #{tpu_custom_call.1} parent=1 // loop_footer_branch
      %13 = sbr.rel target = $region3
    $region8: #{tpu_custom_call.1} parent=1 // loop_exit
      _
    %459 = vsyncpa [#allocation5], 1
    %s460 = scalar_lea.sflag [#allocation5], 1
    %461 = vsyncpa %s460, 1
    %462 = vsyncpa [#allocation8], 1
    %s463 = scalar_lea.sflag [#allocation8], 1
    %464 = vsyncpa %s463, 1
    %465 = vsyncpa [#allocation6], 1
    %s466 = scalar_lea.sflag [#allocation6], 1
    %467 = vsyncpa %s466, 1

</llo_original>
